<compile_context>
chip_gen: v6e
topology: v6e:2x2x1
jax: 0.10.0
libtpu: 0.0.40
codegen_flags: <defaults>
</compile_context>

<pallas_src>
import functools

import jax
import jax.numpy as jnp
from jax.experimental import pallas as pl
from jax.experimental.pallas import tpu as pltpu


def _round_up(a, b):
    return -(-a // b) * b


def _vmem_capacity_bytes():
    """Per-core VMEM capacity; conservative default if the query is unavailable."""
    try:
        info = pltpu.get_tpu_info()
        cap = getattr(info, "vmem_capacity_bytes", None)
        if cap:
            return int(cap)
    except Exception:
        pass
    return 64 << 20  # v7x per-core VMEM; v5e/v6e have 128 MiB.


# --------------------------------------------------------------------------- kernels
def _gl_kernel(x_ref, w_ref, b_ref, g_ref, be_ref, o_ref, *, norm, mxu_transposed):
    # x_ref: (TILE_M, K)   w_ref: (K, N)
    # b_ref: (N, 1) if mxu_transposed else (1, N)
    # g_ref/be_ref: (1, K) o_ref: (N, TILE_M)
    x = x_ref[...]
    if norm:
        xf = x.astype(jnp.float32)
        mean = jnp.mean(xf, axis=-1, keepdims=True)
        msq = jnp.mean(xf * xf, axis=-1, keepdims=True)
        var = jnp.maximum(msq - mean * mean, 0.0)          # one-pass statistics
        xn = (xf - mean) * jax.lax.rsqrt(var + 1e-6)
        xn = xn * g_ref[...].astype(jnp.float32) + be_ref[...].astype(jnp.float32)
        x = xn.astype(x_ref.dtype)                          # native dtype into the MXU

    if mxu_transposed:
        # Contract (K, N) with (TILE_M, K) on K -> (N, TILE_M) straight off the MXU;
        # avoids the large XLU transpose of the result tile (lane-dense store).
        y = jax.lax.dot_general(
            w_ref[...], x,
            dimension_numbers=(((0,), (1,)), ((), ())),
            preferred_element_type=jnp.float32)             # (N, TILE_M)
        y = y + b_ref[...].astype(jnp.float32)              # bias already (N, 1)
        o_ref[...] = y.astype(o_ref.dtype)
    else:
        y = jnp.dot(x, w_ref[...], preferred_element_type=jnp.float32)   # (TILE_M, N)
        y = y + b_ref[...].astype(jnp.float32)
        # Cast to the (possibly narrower) output dtype first, then transpose (XLU):
        # halves vxpose/vst traffic for sub-f32 outputs.
        o_ref[...] = jnp.transpose(y.astype(o_ref.dtype), (1, 0))


def _gl_kernel_ktiled(x_ref, w_ref, b_ref, o_ref, acc_ref):
    # x_ref: (TILE_M, TILE_K)  w_ref: (TILE_K, N)  b_ref: (1, N)
    # o_ref: (N, TILE_M)       acc_ref: (TILE_M, N) f32 scratch
    k = pl.program_id(2)

    @pl.when(k == 0)
    def _():
        acc_ref[...] = jnp.zeros_like(acc_ref)

    acc_ref[...] += jnp.dot(x_ref[...], w_ref[...], preferred_element_type=jnp.float32)

    @pl.when(k == pl.num_programs(2) - 1)
    def _():
        y = acc_ref[...] + b_ref[...].astype(jnp.float32)
        o_ref[...] = jnp.transpose(y.astype(o_ref.dtype), (1, 0))


# --------------------------------------------------------------------------- wrapper
def grouped_linear_forward(x, weight, bias, gamma, beta, *, groups, norm,
                           k_tile=None, single_buffer_resident=True):
    """x: (in_features, D1, D2, D3); weight: (G, K, N) [pre-transposed once at load];
    bias: (G, N); gamma/beta: (G, K).  Returns (out_features, D1, D2, D3)."""
    C, D1, D2, D3 = x.shape
    assert C % groups == 0
    K = C // groups
    N = weight.shape[-1]
    M = D1 * D2 * D3

    in_itemsize = jnp.dtype(x.dtype).itemsize
    out_itemsize = in_itemsize
    w_itemsize = jnp.dtype(weight.dtype).itemsize

    # ---- generation-aware VMEM budget -------------------------------------------
    vmem_cap = _vmem_capacity_bytes()
    budget = int(0.70 * vmem_cap)
    vmem_limit = int(min(max(0.75 * vmem_cap, 32 << 20), 100 << 20))

    def _tile_bytes(tm, tk, k_tiled):
        w_bufs = 2 if k_tiled else (1 if single_buffer_resident else 2)
        b = 2 * tm * tk * in_itemsize                 # streamed x tiles (double-buffered)
        b += 2 * N * tm * out_itemsize                # streamed out tiles (double-buffered)
        b += w_bufs * tk * N * w_itemsize             # weight tile
        b += (N + 2 * K) * 4                          # bias + LN params (tiny)
        b += tm * N * 4                               # f32 result / accumulator
        if norm:
            b += 2 * tm * K * 4                       # f32 LN intermediates
        return b

    # ---- K-reduction tiling (large per-group weights, e.g. v7x 64 MiB VMEM) -----
    if norm:
        # TODO(synk): K-tiling with fused LayerNorm needs full-row statistics; the
        # fused-LN path therefore always keeps the full K resident.
        tile_k = K
    elif k_tile is not None:
        tile_k = int(k_tile)
        assert K % tile_k == 0 and (tile_k == K or tile_k % 128 == 0)
    elif K % 128 != 0 or _tile_bytes(128, K, False) <= budget:
        tile_k = K
    else:
        tile_k = K
        for d in sorted({d for d in range(128, K, 128) if K % d == 0}, reverse=True):
            if _tile_bytes(128, d, True) <= budget:
                tile_k = d
                break
    k_tiled = tile_k < K

    # ---- budget-driven tile_m (largest 128-multiple that fits, capped at 2048) --
    max_tile_m = 128
    for tm in range(256, 2048 + 1, 128):
        if _tile_bytes(tm, tile_k, k_tiled) <= budget:
            max_tile_m = tm
        else:
            break

    if M <= max_tile_m:
        tile_m, m_pad = M, M                          # single full-extent tile, no pad
    else:
        divs = [d for d in range(128, max_tile_m + 1, 128) if M % d == 0]
        if divs:
            tile_m, m_pad = divs[-1], M               # exact tiling, no pad
        else:
            # Rare fallback: minimal padding (one extra HBM pass over the input).
            best = None
            for tm in range(128, max_tile_m + 1, 128):
                pad = _round_up(M, tm)
                if best is None or pad < best[1] or (pad == best[1] and tm > best[0]):
                    best = (tm, pad)
            tile_m, m_pad = best

    # ---- operand layout ----------------------------------------------------------
    xg = x.reshape(groups, M, K)                      # raw row-major reshape (== torch)
    if m_pad != M:
        xg = jnp.pad(xg, ((0, 0), (0, m_pad - M), (0, 0)))

    mxu_transposed = (N >= 128) and not k_tiled       # transposed result straight off MXU
    if mxu_transposed:
        b3 = bias.reshape(groups, N, 1)
        b_blk = (pl.Squeezed(), N, 1)
    else:
        b3 = bias.reshape(groups, 1, N)
        b_blk = (pl.Squeezed(), 1, N)
    g3 = gamma.reshape(groups, 1, K)
    be3 = beta.reshape(groups, 1, K)

    cost = pl.CostEstimate(
        flops=2 * groups * m_pad * K * N,
        transcendentals=groups * m_pad if norm else 0,
        bytes_accessed=groups * (m_pad * K * in_itemsize + K * N * w_itemsize
                                 + (N + 2 * K) * 4 + N * m_pad * out_itemsize),
    )

    def _run(single_buf):
        resident_kw = dict(pipeline_mode=pl.Buffered(1)) if single_buf else {}
        if not k_tiled:
            kernel = functools.partial(_gl_kernel, norm=norm,
                                       mxu_transposed=mxu_transposed)
            grid = (groups, m_pad // tile_m)
            in_specs = [
                pl.BlockSpec((pl.Squeezed(), tile_m, K), lambda g, m: (g, m, 0)),
                pl.BlockSpec((pl.Squeezed(), K, N), lambda g, m: (g, 0, 0), **resident_kw),
                pl.BlockSpec(b_blk, lambda g, m: (g, 0, 0), **resident_kw),
                pl.BlockSpec((pl.Squeezed(), 1, K), lambda g, m: (g, 0, 0), **resident_kw),
                pl.BlockSpec((pl.Squeezed(), 1, K), lambda g, m: (g, 0, 0), **resident_kw),
            ]
            out_spec = pl.BlockSpec((pl.Squeezed(), N, tile_m), lambda g, m: (g, 0, m))
            scratch = []
            sem = ("parallel", "parallel")            # m carries megacore parallelism
            args = (xg, weight, b3, g3, be3)
        else:
            kernel = _gl_kernel_ktiled
            grid = (groups, m_pad // tile_m, K // tile_k)
            in_specs = [
                pl.BlockSpec((pl.Squeezed(), tile_m, tile_k), lambda g, m, k: (g, m, k)),
                pl.BlockSpec((pl.Squeezed(), tile_k, N), lambda g, m, k: (g, k, 0)),
                pl.BlockSpec(b_blk, lambda g, m, k: (g, 0, 0), **resident_kw),
            ]
            out_spec = pl.BlockSpec((pl.Squeezed(), N, tile_m), lambda g, m, k: (g, 0, m))
            scratch = [pltpu.VMEM((tile_m, N), jnp.float32)]
            sem = ("parallel", "parallel", "arbitrary")
            args = (xg, weight, b3)

        return pl.pallas_call(
            kernel,
            out_shape=jax.ShapeDtypeStruct((groups, N, m_pad), x.dtype),
            grid_spec=pltpu.PrefetchScalarGridSpec(
                num_scalar_prefetch=0,
                grid=grid,
                in_specs=in_specs,
                out_specs=out_spec,
                scratch_shapes=scratch,
            ),
            compiler_params=pltpu.CompilerParams(
                dimension_semantics=sem,
                vmem_limit_bytes=vmem_limit,
            ),
            cost_estimate=cost,
        )(*args)

    if single_buffer_resident:
        try:
            out_gnm = _run(True)
        except Exception:
            # Older jax without BlockSpec pipeline_mode / Buffered(1): default buffering.
            out_gnm = _run(False)
    else:
        out_gnm = _run(False)

    if m_pad != M:
        out_gnm = out_gnm[:, :, :M]
    # (G, N, M) -> (G*N, D1, D2, D3) is a free row-major view; exactly
    # torch.cat(..., dim=-1).permute([3, 0, 1, 2]).
    return out_gnm.reshape(groups * N, D1, D2, D3)


# ------------------------------------------------------------------------ reference
def grouped_linear_reference(x, weight, bias, gamma, beta, *, groups, norm):
    """Pure-JAX mirror of the torch forward (for correctness checking)."""
    C, D1, D2, D3 = x.shape
    K = C // groups
    xg = x.reshape(groups, D1, D2, D3, K)
    outs = []
    for g in range(groups):
        h = xg[g]
        if norm:
            mean = h.mean(-1, keepdims=True)
            var = ((h - mean) ** 2).mean(-1, keepdims=True)
            h = (h - mean) / jnp.sqrt(var + 1e-6)
            h = h * gamma[g] + beta[g]
        outs.append(h @ weight[g] + bias[g])
    y = jnp.concatenate(outs, axis=-1)
    return jnp.transpose(y, (3, 0, 1, 2))


if __name__ == "__main__":
    def _run_case(in_features, out_features, groups, dims, norm, k_tile=None):
        K = in_features // groups
        N = out_features // groups
        key = jax.random.PRNGKey(0)
        kx, kw, kb = jax.random.split(key, 3)

        x = jax.random.normal(kx, (in_features, *dims), dtype=jnp.float32)
        bound = 1.0 / (K ** 0.5)
        # torch Linear-style init; weight stored pre-transposed per group (G, K, N).
        weight = jax.random.uniform(kw, (groups, K, N), jnp.float32, -bound, bound)
        bias = jax.random.uniform(kb, (groups, N), jnp.float32, -bound, bound)
        gamma = jnp.ones((groups, K), jnp.float32)
        beta = jnp.zeros((groups, K), jnp.float32)

        out = grouped_linear_forward(x, weight, bias, gamma, beta,
                                     groups=groups, norm=norm, k_tile=k_tile)
        jax.block_until_ready(out)
        ref = grouped_linear_reference(x, weight, bias, gamma, beta,
                                       groups=groups, norm=norm)
        assert out.shape == (out_features, *dims)
        assert bool(jnp.allclose(out, ref, atol=1e-4, rtol=1e-4)), \
            (in_features, out_features, groups, norm, k_tile)

    # Small shapes exercising every kernel path.
    _run_case(16, 32, 2, (2, 4, 8), norm=False)                  # matmul + cast + transpose
    _run_case(16, 32, 2, (2, 4, 8), norm=True)                   # fused LayerNorm
    _run_case(256, 256, 1, (2, 2, 4), norm=False)                # N>=128: transposed result off MXU
    _run_case(256, 256, 1, (2, 2, 4), norm=True)
    _run_case(256, 256, 1, (2, 2, 4), norm=False, k_tile=128)    # K-reduction tiled path

    print("KERNEL_OK")
</pallas_src>

<mosaic_0001>
module attributes {stable_mosaic.version = 11 : i64} {
  func.func @_gl_kernel(%arg0: i32, %arg1: i32, %arg2: memref<1x64x8xf32, #tpu.memory_space<vmem>>, %arg3: memref<1x8x16xf32, #tpu.memory_space<vmem>>, %arg4: memref<1x1x16xf32, #tpu.memory_space<vmem>>, %arg5: memref<1x1x8xf32, #tpu.memory_space<vmem>>, %arg6: memref<1x1x8xf32, #tpu.memory_space<vmem>>, %arg7: memref<1x16x64xf32, #tpu.memory_space<vmem>>) attributes {dimension_semantics = [#tpu.dimension_semantics<parallel>, #tpu.dimension_semantics<parallel>], iteration_bounds = array<i64: 2, 1>, scalar_prefetch = 0 : i64, scratch_operands = 0 : i64, tpu.core_type = #tpu.core_type<tc>, window_params = [{transform_indices = @transform_0, window_bounds = array<i64: 1, 64, 8>}, {pipeline_mode = #tpu.pipeline_mode<synchronous>, transform_indices = @transform_1, window_bounds = array<i64: 1, 8, 16>}, {pipeline_mode = #tpu.pipeline_mode<synchronous>, transform_indices = @transform_2, window_bounds = array<i64: 1, 1, 16>}, {pipeline_mode = #tpu.pipeline_mode<synchronous>, transform_indices = @transform_3, window_bounds = array<i64: 1, 1, 8>}, {pipeline_mode = #tpu.pipeline_mode<synchronous>, transform_indices = @transform_4, window_bounds = array<i64: 1, 1, 8>}, {transform_indices = @transform_5, window_bounds = array<i64: 1, 16, 64>}]} {
    %c0 = arith.constant 0 : index
    %c0_0 = arith.constant 0 : index
    %c0_1 = arith.constant 0 : index
    %0 = vector.load %arg2[%c0, %c0_0, %c0_1] : memref<1x64x8xf32, #tpu.memory_space<vmem>>, vector<1x64x8xf32>
    %1 = vector.shape_cast %0 : vector<1x64x8xf32> to vector<64x8xf32>
    %c0_2 = arith.constant 0 : index
    %c0_3 = arith.constant 0 : index
    %c0_4 = arith.constant 0 : index
    %2 = vector.load %arg3[%c0_2, %c0_3, %c0_4] : memref<1x8x16xf32, #tpu.memory_space<vmem>>, vector<1x8x16xf32>
    %3 = vector.shape_cast %2 : vector<1x8x16xf32> to vector<8x16xf32>
    %cst = arith.constant dense<0.000000e+00> : vector<64x16xf32>
    %4 = tpu.matmul %1, %3, %cst {dimension_numbers = #tpu.dot_dimension_numbers<[1], [0], [0], [1], [0, 0, 1, 1], [], []>} : vector<64x8xf32>, vector<8x16xf32>, vector<64x16xf32> -> vector<64x16xf32>
    %c0_5 = arith.constant 0 : index
    %c0_6 = arith.constant 0 : index
    %c0_7 = arith.constant 0 : index
    %5 = vector.load %arg4[%c0_5, %c0_6, %c0_7] : memref<1x1x16xf32, #tpu.memory_space<vmem>>, vector<1x1x16xf32>
    %6 = vector.shape_cast %5 : vector<1x1x16xf32> to vector<1x16xf32>
    %7 = vector.broadcast %6 : vector<1x16xf32> to vector<64x16xf32>
    %8 = arith.addf %4, %7 : vector<64x16xf32>
    %9 = tpu.transpose %8, [1, 0] : vector<64x16xf32> -> vector<16x64xf32>
    %c0_8 = arith.constant 0 : index
    %c0_9 = arith.constant 0 : index
    %c0_10 = arith.constant 0 : index
    %10 = vector.load %arg7[%c0_8, %c0_9, %c0_10] : memref<1x16x64xf32, #tpu.memory_space<vmem>>, vector<1x16x64xf32>
    %11 = vector.shape_cast %10 : vector<1x16x64xf32> to vector<16x64xf32>
    %12 = vector.shape_cast %9 : vector<16x64xf32> to vector<1x16x64xf32>
    tpu.vector_store %arg7[%c0_8, %c0_9, %c0_10], %12 {strides = array<i32>} : memref<1x16x64xf32, #tpu.memory_space<vmem>>, vector<1x16x64xf32>,
    return
  }
  func.func @transform_0(%arg0: i32, %arg1: i32) -> (i32, i32, i32) {
    %c0_i32 = arith.constant 0 : i32
    %c0_i32_0 = arith.constant 0 : i32
    return %arg0, %arg1, %c0_i32 : i32, i32, i32
  }
  func.func @transform_1(%arg0: i32, %arg1: i32) -> (i32, i32, i32) {
    %c0_i32 = arith.constant 0 : i32
    %c0_i32_0 = arith.constant 0 : i32
    %c0_i32_1 = arith.constant 0 : i32
    return %arg0, %c0_i32, %c0_i32_0 : i32, i32, i32
  }
  func.func @transform_2(%arg0: i32, %arg1: i32) -> (i32, i32, i32) {
    %c0_i32 = arith.constant 0 : i32
    %c0_i32_0 = arith.constant 0 : i32
    %c0_i32_1 = arith.constant 0 : i32
    return %arg0, %c0_i32, %c0_i32_0 : i32, i32, i32
  }
  func.func @transform_3(%arg0: i32, %arg1: i32) -> (i32, i32, i32) {
    %c0_i32 = arith.constant 0 : i32
    %c0_i32_0 = arith.constant 0 : i32
    %c0_i32_1 = arith.constant 0 : i32
    return %arg0, %c0_i32, %c0_i32_0 : i32, i32, i32
  }
  func.func @transform_4(%arg0: i32, %arg1: i32) -> (i32, i32, i32) {
    %c0_i32 = arith.constant 0 : i32
    %c0_i32_0 = arith.constant 0 : i32
    %c0_i32_1 = arith.constant 0 : i32
    return %arg0, %c0_i32, %c0_i32_0 : i32, i32, i32
  }
  func.func @transform_5(%arg0: i32, %arg1: i32) -> (i32, i32, i32) {
    %c0_i32 = arith.constant 0 : i32
    %c0_i32_0 = arith.constant 0 : i32
    return %arg0, %c0_i32, %arg1 : i32, i32, i32
  }
}

module attributes {stable_mosaic.version = 11 : i64} {
  func.func @_gl_kernel(%arg0: i32, %arg1: i32, %arg2: memref<1x64x8xf32, #tpu.memory_space<vmem>>, %arg3: memref<1x8x16xf32, #tpu.memory_space<vmem>>, %arg4: memref<1x1x16xf32, #tpu.memory_space<vmem>>, %arg5: memref<1x1x8xf32, #tpu.memory_space<vmem>>, %arg6: memref<1x1x8xf32, #tpu.memory_space<vmem>>, %arg7: memref<1x16x64xf32, #tpu.memory_space<vmem>>) attributes {dimension_semantics = [#tpu.dimension_semantics<parallel>, #tpu.dimension_semantics<parallel>], iteration_bounds = array<i64: 2, 1>, scalar_prefetch = 0 : i64, scratch_operands = 0 : i64, tpu.core_type = #tpu.core_type<tc>, window_params = [{transform_indices = @transform_0, window_bounds = array<i64: 1, 64, 8>}, {transform_indices = @transform_1, window_bounds = array<i64: 1, 8, 16>}, {transform_indices = @transform_2, window_bounds = array<i64: 1, 1, 16>}, {transform_indices = @transform_3, window_bounds = array<i64: 1, 1, 8>}, {transform_indices = @transform_4, window_bounds = array<i64: 1, 1, 8>}, {transform_indices = @transform_5, window_bounds = array<i64: 1, 16, 64>}]} {
    %c0 = arith.constant 0 : index
    %c0_0 = arith.constant 0 : index
    %c0_1 = arith.constant 0 : index
    %0 = vector.load %arg2[%c0, %c0_0, %c0_1] : memref<1x64x8xf32, #tpu.memory_space<vmem>>, vector<1x64x8xf32>
    %1 = vector.shape_cast %0 : vector<1x64x8xf32> to vector<64x8xf32>
    %c0_2 = arith.constant 0 : index
    %c0_3 = arith.constant 0 : index
    %c0_4 = arith.constant 0 : index
    %2 = vector.load %arg3[%c0_2, %c0_3, %c0_4] : memref<1x8x16xf32, #tpu.memory_space<vmem>>, vector<1x8x16xf32>
    %3 = vector.shape_cast %2 : vector<1x8x16xf32> to vector<8x16xf32>
    %cst = arith.constant dense<0.000000e+00> : vector<64x16xf32>
    %4 = tpu.matmul %1, %3, %cst {dimension_numbers = #tpu.dot_dimension_numbers<[1], [0], [0], [1], [0, 0, 1, 1], [], []>} : vector<64x8xf32>, vector<8x16xf32>, vector<64x16xf32> -> vector<64x16xf32>
    %c0_5 = arith.constant 0 : index
    %c0_6 = arith.constant 0 : index
    %c0_7 = arith.constant 0 : index
    %5 = vector.load %arg4[%c0_5, %c0_6, %c0_7] : memref<1x1x16xf32, #tpu.memory_space<vmem>>, vector<1x1x16xf32>
    %6 = vector.shape_cast %5 : vector<1x1x16xf32> to vector<1x16xf32>
    %7 = vector.broadcast %6 : vector<1x16xf32> to vector<64x16xf32>
    %8 = arith.addf %4, %7 : vector<64x16xf32>
    %9 = tpu.transpose %8, [1, 0] : vector<64x16xf32> -> vector<16x64xf32>
    %c0_8 = arith.constant 0 : index
    %c0_9 = arith.constant 0 : index
    %c0_10 = arith.constant 0 : index
    %10 = vector.load %arg7[%c0_8, %c0_9, %c0_10] : memref<1x16x64xf32, #tpu.memory_space<vmem>>, vector<1x16x64xf32>
    %11 = vector.shape_cast %10 : vector<1x16x64xf32> to vector<16x64xf32>
    %12 = vector.shape_cast %9 : vector<16x64xf32> to vector<1x16x64xf32>
    tpu.vector_store %arg7[%c0_8, %c0_9, %c0_10], %12 {strides = array<i32>} : memref<1x16x64xf32, #tpu.memory_space<vmem>>, vector<1x16x64xf32>,
    return
  }
  func.func @transform_0(%arg0: i32, %arg1: i32) -> (i32, i32, i32) {
    %c0_i32 = arith.constant 0 : i32
    %c0_i32_0 = arith.constant 0 : i32
    return %arg0, %arg1, %c0_i32 : i32, i32, i32
  }
  func.func @transform_1(%arg0: i32, %arg1: i32) -> (i32, i32, i32) {
    %c0_i32 = arith.constant 0 : i32
    %c0_i32_0 = arith.constant 0 : i32
    %c0_i32_1 = arith.constant 0 : i32
    return %arg0, %c0_i32, %c0_i32_0 : i32, i32, i32
  }
  func.func @transform_2(%arg0: i32, %arg1: i32) -> (i32, i32, i32) {
    %c0_i32 = arith.constant 0 : i32
    %c0_i32_0 = arith.constant 0 : i32
    %c0_i32_1 = arith.constant 0 : i32
    return %arg0, %c0_i32, %c0_i32_0 : i32, i32, i32
  }
  func.func @transform_3(%arg0: i32, %arg1: i32) -> (i32, i32, i32) {
    %c0_i32 = arith.constant 0 : i32
    %c0_i32_0 = arith.constant 0 : i32
    %c0_i32_1 = arith.constant 0 : i32
    return %arg0, %c0_i32, %c0_i32_0 : i32, i32, i32
  }
  func.func @transform_4(%arg0: i32, %arg1: i32) -> (i32, i32, i32) {
    %c0_i32 = arith.constant 0 : i32
    %c0_i32_0 = arith.constant 0 : i32
    %c0_i32_1 = arith.constant 0 : i32
    return %arg0, %c0_i32, %c0_i32_0 : i32, i32, i32
  }
  func.func @transform_5(%arg0: i32, %arg1: i32) -> (i32, i32, i32) {
    %c0_i32 = arith.constant 0 : i32
    %c0_i32_0 = arith.constant 0 : i32
    return %arg0, %c0_i32, %arg1 : i32, i32, i32
  }
}

</mosaic_0001>

<llo_original>
// kernel: tpu_custom_call.1
$region0: #{tpu_custom_call.1}
  #allocation0 [shape = 'u32[]', space=smem, size = 0x4, offset = 0x4, fixed_abs, tag = 'smem constant byte address 0x4 - core index']
  #allocation1 [shape = 'u32[144,128]{1,0:T(1,128)}', space=vmem, size = 0x12000, scoped, tag = 'internal scratch']
  %s0 = inlined_call_operand.vmem [shape: f32[2,64,8], index: 0, kind: input, shape index: {}]
  %s1 = inlined_call_operand.vmem [shape: f32[2,8,16], index: 1, kind: input, shape index: {}]
  %s2 = inlined_call_operand.vmem [shape: f32[2,1,16], index: 2, kind: input, shape index: {}]
  %s3 = inlined_call_operand.vmem [shape: f32[2,1,8], index: 3, kind: input, shape index: {}]
  %s4 = inlined_call_operand.vmem [shape: f32[2,1,8], index: 4, kind: input, shape index: {}]
  %s5 = inlined_call_operand.hbm [shape: f32[2,16,64], index: 5, kind: output, shape index: {}]
  %s6 = sld [smem:[#allocation0]]
  $region53: #{tpu_custom_call.1} parent=0
    _
  %s8 = ssub.s32 1, %s6
  %s9 = scalar_select 0, %s8, %s6
  $region1: #{tpu_custom_call.1} parent=0
    #allocation2 [shape = 'u8[16384]{0}', space=vmem, size = 0x4000, scoped, tag = 'output window, operand 0']
    #allocation3 [shape = 's32[2]{0}', space=sflag, size = 0x8, scoped, tag = 'scoped memory for tpu_custom_call.1']
    %10 = vsyncpa [#allocation3], 0
    %s11 = scalar_lea.sflag [#allocation3], 1
    %12 = vsyncpa %s11, 0
    loop: start=0, step=1, limit=4
    $region2: #{tpu_custom_call.1} parent=1 // loop_pre_header
      _
    $region3: #{tpu_custom_call.1} parent=1 // loop_header
      %s14 = sphi 0, %s18
      %p15 = scmp.ge.s32.totalorder %s14, 4
      %s21 = sphi 0, %s33
      %s22 = sphi 0, %s29
      %s23 = sphi 0, %s21
      %s24 = sphi 0, %s22
      %s25 = sphi 0, %s23
      %s26 = sphi 0, %s24
      %s38 = sphi 0, %s40
      %s41 = sphi 0, %s38
      %s42 = sphi 0, %s41
      %s58 = sphi 0, %s42
      %s64 = sphi 0, %s66
      %s67 = sphi 0, %s64
      %s68 = sphi 0, %s67
      %s84 = sphi 0, %s68
      %s90 = sphi 0, %s92
      %s93 = sphi 0, %s90
      %s94 = sphi 0, %s93
      %s110 = sphi 0, %s94
      %s116 = sphi 0, %s118
      %s119 = sphi 0, %s116
      %s120 = sphi 0, %s119
      %s136 = sphi 0, %s120
      %s142 = sphi 0, %s144
      %s145 = sphi 0, %s142
      %s146 = sphi 0, %s145
      %s162 = sphi 0, %s146
      %s170 = sphi 0, %s172
      %s173 = sphi 0, %s170
      %s174 = sphi 0, %s173
      %s190 = sphi 0, %s174
    $region4: #{tpu_custom_call.1} parent=1 // loop_header_branch
      %17 = sbr.rel (%p15) target = $region8
    $region5: #{tpu_custom_call.1} parent=1 // loop_body
      %s19 = ssub.s32 %s14, 1
      %s20 = ssub.s32 %s14, 2
      %s27 = sadd.s32 1, %s22
      %p28 = scmp.ge.s32.totalorder %s27, 1
      %s29 = scalar_select %p28, 0, %s27
      %s30 = sadd.s32 1, %s21
      %s31 = scalar_select %p28, %s30, %s21
      %p32 = scmp.ge.s32.totalorder %s31, 2
      %s33 = scalar_select %p32, 0, %s31
      %s34 = ssub.s32 %s21, %s33
      %s35 = ssub.s32 %s22, %s29
      %s36 = sor.u32 %s34, %s35
      %p37 = scmp.eq.s32.totalorder %s36, 0
      %s39 = sadd.s32 %s38, 1
      %s40 = scalar_select %p37, %s38, %s39
      %p43 = pneg %p37
      %p44 = scmp.eq.s32.totalorder %s14, 1
      %p45 = por %p43, %p44
      %p46 = scmp.ne.s32.totalorder %s38, %s41
      %p47 = scmp.eq.s32.totalorder %s14, 0
      %p48 = por %p46, %p47
      %p49 = scmp.ne.s32.totalorder %s38, %s41
      %p50 = scmp.eq.s32.totalorder %s19, 1
      %p51 = por %p49, %p50
      %p52 = scmp.ne.s32.totalorder %s41, %s42
      %p53 = scmp.eq.s32.totalorder %s19, 0
      %p54 = por %p52, %p53
      %p55 = scmp.ne.s32.totalorder %s41, %s42
      %p56 = scmp.eq.s32.totalorder %s20, 1
      %p57 = por %p55, %p56
      %p59 = scmp.ne.s32.totalorder %s42, %s58
      %p60 = scmp.eq.s32.totalorder %s20, 0
      %p61 = por %p59, %p60
      %s62 = ssub.s32 %s21, %s33
      %p63 = scmp.eq.s32.totalorder %s62, 0
      %s65 = sadd.s32 %s64, 1
      %s66 = scalar_select %p63, %s64, %s65
      %p69 = pneg %p63
      %p70 = scmp.eq.s32.totalorder %s14, 1
      %p71 = por %p69, %p70
      %p72 = scmp.ne.s32.totalorder %s64, %s67
      %p73 = scmp.eq.s32.totalorder %s14, 0
      %p74 = por %p72, %p73
      %p75 = scmp.ne.s32.totalorder %s64, %s67
      %p76 = scmp.eq.s32.totalorder %s19, 1
      %p77 = por %p75, %p76
      %p78 = scmp.ne.s32.totalorder %s67, %s68
      %p79 = scmp.eq.s32.totalorder %s19, 0
      %p80 = por %p78, %p79
      %p81 = scmp.ne.s32.totalorder %s67, %s68
      %p82 = scmp.eq.s32.totalorder %s20, 1
      %p83 = por %p81, %p82
      %p85 = scmp.ne.s32.totalorder %s68, %s84
      %p86 = scmp.eq.s32.totalorder %s20, 0
      %p87 = por %p85, %p86
      %s88 = ssub.s32 %s21, %s33
      %p89 = scmp.eq.s32.totalorder %s88, 0
      %s91 = sadd.s32 %s90, 1
      %s92 = scalar_select %p89, %s90, %s91
      %p95 = pneg %p89
      %p96 = scmp.eq.s32.totalorder %s14, 1
      %p97 = por %p95, %p96
      %p98 = scmp.ne.s32.totalorder %s90, %s93
      %p99 = scmp.eq.s32.totalorder %s14, 0
      %p100 = por %p98, %p99
      %p101 = scmp.ne.s32.totalorder %s90, %s93
      %p102 = scmp.eq.s32.totalorder %s19, 1
      %p103 = por %p101, %p102
      %p104 = scmp.ne.s32.totalorder %s93, %s94
      %p105 = scmp.eq.s32.totalorder %s19, 0
      %p106 = por %p104, %p105
      %p107 = scmp.ne.s32.totalorder %s93, %s94
      %p108 = scmp.eq.s32.totalorder %s20, 1
      %p109 = por %p107, %p108
      %p111 = scmp.ne.s32.totalorder %s94, %s110
      %p112 = scmp.eq.s32.totalorder %s20, 0
      %p113 = por %p111, %p112
      %s114 = ssub.s32 %s21, %s33
      %p115 = scmp.eq.s32.totalorder %s114, 0
      %s117 = sadd.s32 %s116, 1
      %s118 = scalar_select %p115, %s116, %s117
      %p121 = pneg %p115
      %p122 = scmp.eq.s32.totalorder %s14, 1
      %p123 = por %p121, %p122
      %p124 = scmp.ne.s32.totalorder %s116, %s119
      %p125 = scmp.eq.s32.totalorder %s14, 0
      %p126 = por %p124, %p125
      %p127 = scmp.ne.s32.totalorder %s116, %s119
      %p128 = scmp.eq.s32.totalorder %s19, 1
      %p129 = por %p127, %p128
      %p130 = scmp.ne.s32.totalorder %s119, %s120
      %p131 = scmp.eq.s32.totalorder %s19, 0
      %p132 = por %p130, %p131
      %p133 = scmp.ne.s32.totalorder %s119, %s120
      %p134 = scmp.eq.s32.totalorder %s20, 1
      %p135 = por %p133, %p134
      %p137 = scmp.ne.s32.totalorder %s120, %s136
      %p138 = scmp.eq.s32.totalorder %s20, 0
      %p139 = por %p137, %p138
      %s140 = ssub.s32 %s21, %s33
      %p141 = scmp.eq.s32.totalorder %s140, 0
      %s143 = sadd.s32 %s142, 1
      %s144 = scalar_select %p141, %s142, %s143
      %p147 = pneg %p141
      %p148 = scmp.eq.s32.totalorder %s14, 1
      %p149 = por %p147, %p148
      %p150 = scmp.ne.s32.totalorder %s142, %s145
      %p151 = scmp.eq.s32.totalorder %s14, 0
      %p152 = por %p150, %p151
      %p153 = scmp.ne.s32.totalorder %s142, %s145
      %p154 = scmp.eq.s32.totalorder %s19, 1
      %p155 = por %p153, %p154
      %p156 = scmp.ne.s32.totalorder %s145, %s146
      %p157 = scmp.eq.s32.totalorder %s19, 0
      %p158 = por %p156, %p157
      %p159 = scmp.ne.s32.totalorder %s145, %s146
      %p160 = scmp.eq.s32.totalorder %s20, 1
      %p161 = por %p159, %p160
      %p163 = scmp.ne.s32.totalorder %s146, %s162
      %p164 = scmp.eq.s32.totalorder %s20, 0
      %p165 = por %p163, %p164
      %s166 = ssub.s32 %s21, %s33
      %s167 = ssub.s32 %s22, %s29
      %s168 = sor.u32 %s166, %s167
      %p169 = scmp.eq.s32.totalorder %s168, 0
      %s171 = sadd.s32 %s170, 1
      %s172 = scalar_select %p169, %s170, %s171
      %p175 = pneg %p169
      %p176 = scmp.eq.s32.totalorder %s14, 1
      %p177 = por %p175, %p176
      %p178 = scmp.ne.s32.totalorder %s170, %s173
      %p179 = scmp.eq.s32.totalorder %s14, 0
      %p180 = por %p178, %p179
      %p181 = scmp.ne.s32.totalorder %s170, %s173
      %p182 = scmp.eq.s32.totalorder %s19, 1
      %p183 = por %p181, %p182
      %p184 = scmp.ne.s32.totalorder %s173, %s174
      %p185 = scmp.eq.s32.totalorder %s19, 0
      %p186 = por %p184, %p185
      %p187 = scmp.ne.s32.totalorder %s173, %s174
      %p188 = scmp.eq.s32.totalorder %s20, 1
      %p189 = por %p187, %p188
      %p191 = scmp.ne.s32.totalorder %s174, %s190
      %p192 = scmp.eq.s32.totalorder %s20, 0
      %p193 = por %p191, %p192
      %p194 = scmp.le.s32.totalorder 1, %s14
      %p195 = scmp.lt.s32.totalorder %s14, 3
      %p196 = pnand %p194, %p195
      %p197 = pneg %p196
      // Predicated region
      $region9: #{tpu_custom_call.1} parent=5 // pred_check
        _
      $region10: #{tpu_custom_call.1} parent=5 // pred_check_branch
        %199 = sbr.rel (%p196) target = $region12
      $region11: #{tpu_custom_call.1} parent=5 // pred_region
        %s200 = ssub.s32 %s14, 1
        // Predicated region
        $region13: #{tpu_custom_call.1} parent=11 // pred_check
          %p201 = pneg %p80
        $region14: #{tpu_custom_call.1} parent=11 // pred_check_branch
          %203 = sbr.rel (%p201) target = $region16
        $region15: #{tpu_custom_call.1} parent=11 // pred_region
          %p204 = scmp.lt.s32.totalorder %s23, 1
          %s205 = scalar_select %p204, %s23, 1
          %s206 = smul.addr %s205, 8
          %s207 = scalar_lea.vmem %s1, %s206
        $region16: #{tpu_custom_call.1} parent=11 // pred_fallthru
          _
        // Predicated region
        $region17: #{tpu_custom_call.1} parent=11 // pred_check
          %p208 = pneg %p106
        $region18: #{tpu_custom_call.1} parent=11 // pred_check_branch
          %210 = sbr.rel (%p208) target = $region20
        $region19: #{tpu_custom_call.1} parent=11 // pred_region
          %p211 = scmp.lt.s32.totalorder %s23, 1
          %s212 = scalar_select %p211, %s23, 1
          %s213 = scalar_lea.vmem %s2, %s212
        $region20: #{tpu_custom_call.1} parent=11 // pred_fallthru
          _
        // Predicated region
        $region21: #{tpu_custom_call.1} parent=11 // pred_check
          %p214 = pneg %p132
        $region22: #{tpu_custom_call.1} parent=11 // pred_check_branch
          %216 = sbr.rel (%p214) target = $region24
        $region23: #{tpu_custom_call.1} parent=11 // pred_region
          %p217 = scmp.lt.s32.totalorder %s23, 1
          %s218 = scalar_select %p217, %s23, 1
          %s219 = scalar_lea.vmem %s3, %s218
        $region24: #{tpu_custom_call.1} parent=11 // pred_fallthru
          _
        // Predicated region
        $region25: #{tpu_custom_call.1} parent=11 // pred_check
          %p220 = pneg %p158
        $region26: #{tpu_custom_call.1} parent=11 // pred_check_branch
          %222 = sbr.rel (%p220) target = $region28
        $region27: #{tpu_custom_call.1} parent=11 // pred_region
          %p223 = scmp.lt.s32.totalorder %s23, 1
          %s224 = scalar_select %p223, %s23, 1
          %s225 = scalar_lea.vmem %s4, %s224
        $region28: #{tpu_custom_call.1} parent=11 // pred_fallthru
          _
      $region12: #{tpu_custom_call.1} parent=5 // pred_fallthru
        _
      %p226 = scmp.lt.s32.totalorder %s14, 2
      // Predicated region
      $region29: #{tpu_custom_call.1} parent=5 // pred_check
        %p227 = pneg %p226
      $region30: #{tpu_custom_call.1} parent=5 // pred_check_branch
        %229 = sbr.rel (%p227) target = $region32
      $region31: #{tpu_custom_call.1} parent=5 // pred_region
        // Predicated region
        $region33: #{tpu_custom_call.1} parent=31 // pred_check
          %p230 = pneg %p48
        $region34: #{tpu_custom_call.1} parent=31 // pred_check_branch
          %232 = sbr.rel (%p230) target = $region36
        $region35: #{tpu_custom_call.1} parent=31 // pred_region
          %s233 = smul.u32 8, %s22
          %p234 = scmp.lt.s32.totalorder %s21, 1
          %s235 = scalar_select %p234, %s21, 1
          %p236 = scmp.lt.s32.totalorder %s233, 7
          %s237 = scalar_select %p236, %s233, 7
          %s238 = smul.addr %s235, 8
          %s239 = sadd.s32 %s237, %s238
          %s240 = smul.addr %s239, 8
          %s241 = scalar_lea.vmem %s0, %s240
          %s242 = smul.u32 8, %s22
        $region36: #{tpu_custom_call.1} parent=31 // pred_fallthru
          _
      $region32: #{tpu_custom_call.1} parent=5 // pred_fallthru
        _
      %p243 = scmp.le.s32.totalorder 1, %s14
      %p244 = scmp.lt.s32.totalorder %s14, 3
      %p245 = pnand %p243, %p244
      %p246 = pneg %p245
      // Predicated region
      $region37: #{tpu_custom_call.1} parent=5 // pred_check
        _
      $region38: #{tpu_custom_call.1} parent=5 // pred_check_branch
        %248 = sbr.rel (%p245) target = $region40
      $region39: #{tpu_custom_call.1} parent=5 // pred_region
        %s249 = ssub.s32 %s14, 1
        %s250 = smul.u32 8, %s24
        %p251 = scmp.lt.s32.totalorder %s23, 1
        %s252 = scalar_select %p251, %s23, 1
        %p253 = scmp.lt.s32.totalorder %s250, 7
        %s254 = scalar_select %p253, %s250, 7
        %s255 = smul.addr %s252, 8
        %s256 = sadd.s32 %s254, %s255
        %s257 = smul.addr %s256, 8
        %s258 = scalar_lea.vmem %s0, %s257
        %p259 = pneg %p54
        %p260 = pneg %p51
        %p261 = scmp.lt.s32.totalorder %s23, 1
        %s262 = scalar_select %p261, %s23, 1
        %s263 = smul.addr %s262, 8
        %s264 = scalar_lea.vmem %s1, %s263
        %p265 = pneg %p80
        %p266 = pneg %p77
        %p267 = scmp.lt.s32.totalorder %s23, 1
        %s268 = scalar_select %p267, %s23, 1
        %s269 = scalar_lea.vmem %s2, %s268
        %p270 = pneg %p106
        %p271 = pneg %p103
        %p272 = scmp.lt.s32.totalorder %s23, 1
        %s273 = scalar_select %p272, %s23, 1
        %s274 = scalar_lea.vmem %s3, %s273
        %p275 = pneg %p132
        %p276 = pneg %p129
        %p277 = scmp.lt.s32.totalorder %s23, 1
        %s278 = scalar_select %p277, %s23, 1
        %s279 = scalar_lea.vmem %s4, %s278
        %p280 = pneg %p158
        %p281 = pneg %p155
        %p282 = pneg %p186
        %p283 = pneg %p183
        %s284 = sand.u32 %s173, 1
        %s285 = scalar_lea.sflag [#allocation3], %s284
        %s286 = sand.u32 %s173, 1
        %s287 = smul.addr %s286, 16
        %s288 = scalar_lea.vmem [#allocation2], %s287
        %s289 = smul.u32 8, %s24
        %p290 = scmp.lt.s32.totalorder %s23, 1
        %s291 = scalar_select %p290, %s23, 1
        %p292 = scmp.lt.s32.totalorder %s289, 7
        %s293 = scalar_select %p292, %s289, 7
        %s294 = smul.addr %s291, 8
        %s295 = sadd.s32 %s293, %s294
        %s296 = smul.addr %s295, 8
        %s297 = scalar_lea.vmem %s0, %s296
        %s298 = smul.u32 8, %s24
        %p299 = scmp.lt.s32.totalorder %s23, 1
        %s300 = scalar_select %p299, %s23, 1
        %s301 = smul.addr %s300, 8
        %s302 = scalar_lea.vmem %s1, %s301
        %p303 = scmp.lt.s32.totalorder %s23, 1
        %s304 = scalar_select %p303, %s23, 1
        %s305 = scalar_lea.vmem %s2, %s304
        %p306 = scmp.lt.s32.totalorder %s23, 1
        %s307 = scalar_select %p306, %s23, 1
        %s308 = scalar_lea.vmem %s3, %s307
        %p309 = scmp.lt.s32.totalorder %s23, 1
        %s310 = scalar_select %p309, %s23, 1
        %s311 = scalar_lea.vmem %s4, %s310
        %v312 = vld [vmem:[%s297] sm:$0xff]
        %v313 = vld [vmem:[%s297 + $0x8] sm:$0xff]
        %v314 = vld [vmem:[%s297 + $0x10] sm:$0xff]
        %v315 = vld [vmem:[%s297 + $0x18] sm:$0xff]
        %v316 = vld [vmem:[%s297 + $0x20] sm:$0xff]
        %v317 = vld [vmem:[%s297 + $0x28] sm:$0xff]
        %v318 = vld [vmem:[%s297 + $0x30] sm:$0xff]
        %v319 = vld [vmem:[%s297 + $0x38] sm:$0xff]
        %v320 = vld [vmem:[%s302] sm:$0xff]
        %v321 = vld [vmem:[%s305] sm:$0x1]
        %v323 = vlaneseq
        %v324 = vshrl.u32 %v323, 7
        %v325 = vsub.s32 0, %v324
        %v326 = vrot.slane %v321, %v325
        %vm328 = vcmask 64512
        %v330 = vsel %vm328, %v312, 0
        %v333 = vsel %vm328, %v313, 0
        %v336 = vsel %vm328, %v314, 0
        %v339 = vsel %vm328, %v315, 0
        %v342 = vsel %vm328, %v316, 0
        %v345 = vsel %vm328, %v317, 0
        %v348 = vsel %vm328, %v318, 0
        %v351 = vsel %vm328, %v319, 0
        %353 = vmatprep.subr.mxu0 0.0
        %354 = vmatpush1.msra.mxu0 0.0
        %355 = vmatprep.subr.mxu0 0.0
        %356 = vmatpush1.msra.mxu0 0.0
        %357 = vmatprep.subr.mxu0 0.0
        %358 = vmatpush1.msra.mxu0 0.0
        %359 = vmatprep.subr.mxu0 0.0
        %360 = vmatpush1.msra.mxu0 0.0
        %361 = vmatprep.subr.mxu0 0.0
        %362 = vmatpush1.msra.mxu0 0.0
        %363 = vmatprep.subr.mxu0 0.0
        %364 = vmatpush1.msra.mxu0 0.0
        %365 = vmatprep.subr.mxu0 0.0
        %366 = vmatpush1.msra.mxu0 0.0
        %367 = vmatprep.subr.mxu0 0.0
        %368 = vmatpush1.msra.mxu0 0.0
        %369 = vmatprep.subr.mxu0 0.0
        %370 = vmatpush1.msra.mxu0 0.0
        %371 = vmatprep.subr.mxu0 0.0
        %372 = vmatpush1.msra.mxu0 0.0
        %373 = vmatprep.subr.mxu0 0.0
        %374 = vmatpush1.msra.mxu0 0.0
        %375 = vmatprep.subr.mxu0 0.0
        %376 = vmatpush1.msra.mxu0 0.0
        %377 = vmatprep.subr.mxu0 0.0
        %378 = vmatpush1.msra.mxu0 0.0
        %379 = vmatprep.subr.mxu0 0.0
        %380 = vmatpush1.msra.mxu0 0.0
        %381 = vmatprep.subr.mxu0 0.0
        %382 = vmatpush1.msra.mxu0 0.0
        %383 = vmatprep.subr.mxu0 0.0
        %384 = vmatpush1.msra.mxu0 %v320
        %385 = vmatprep.subr.mxu0 0.0
        %386 = vmatpush2.msra.mxu0 0.0
        %387 = vmatprep.subr.mxu0 0.0
        %388 = vmatpush2.msra.mxu0 0.0
        %389 = vmatprep.subr.mxu0 0.0
        %390 = vmatpush2.msra.mxu0 0.0
        %391 = vmatprep.subr.mxu0 0.0
        %392 = vmatpush2.msra.mxu0 0.0
        %393 = vmatprep.subr.mxu0 0.0
        %394 = vmatpush2.msra.mxu0 0.0
        %395 = vmatprep.subr.mxu0 0.0
        %396 = vmatpush2.msra.mxu0 0.0
        %397 = vmatprep.subr.mxu0 0.0
        %398 = vmatpush2.msra.mxu0 0.0
        %399 = vmatprep.subr.mxu0 0.0
        %400 = vmatpush2.msra.mxu0 0.0
        %401 = vmatprep.subr.mxu0 0.0
        %402 = vmatpush2.msra.mxu0 0.0
        %403 = vmatprep.subr.mxu0 0.0
        %404 = vmatpush2.msra.mxu0 0.0
        %405 = vmatprep.subr.mxu0 0.0
        %406 = vmatpush2.msra.mxu0 0.0
        %407 = vmatprep.subr.mxu0 0.0
        %408 = vmatpush2.msra.mxu0 0.0
        %409 = vmatprep.subr.mxu0 0.0
        %410 = vmatpush2.msra.mxu0 0.0
        %411 = vmatprep.subr.mxu0 0.0
        %412 = vmatpush2.msra.mxu0 0.0
        %413 = vmatprep.subr.mxu0 0.0
        %414 = vmatpush2.msra.mxu0 0.0
        %415 = vmatprep.subr.mxu0 0.0
        %416 = vmatpush2.msra.mxu0 0.0
        %417 = vmatprep.mubr.f32.mxu0 0.0
        %418 = vmatmul.mubr.f32.gmra.mxu0 %v330
        %v419 = vpop.f32.mrf.mxu0
        %v420 = vadd.f32 %v326, %v419
        %v421 = vpop.f32.mrf.mxu0
        %422 = vmatprep.mubr.f32.mxu0 0.0
        %423 = vmatmul.mubr.f32.gmra.mxu0 %v333
        %v424 = vpop.f32.mrf.mxu0
        %v425 = vadd.f32 %v326, %v424
        %v426 = vpop.f32.mrf.mxu0
        %427 = vmatprep.mubr.f32.mxu0 0.0
        %428 = vmatmul.mubr.f32.gmra.mxu0 %v336
        %v429 = vpop.f32.mrf.mxu0
        %v430 = vadd.f32 %v326, %v429
        %v431 = vpop.f32.mrf.mxu0
        %432 = vmatprep.mubr.f32.mxu0 0.0
        %433 = vmatmul.mubr.f32.gmra.mxu0 %v339
        %v434 = vpop.f32.mrf.mxu0
        %v435 = vadd.f32 %v326, %v434
        %v436 = vpop.f32.mrf.mxu0
        %437 = vmatprep.mubr.f32.mxu0 0.0
        %438 = vmatmul.mubr.f32.gmra.mxu0 %v342
        %v439 = vpop.f32.mrf.mxu0
        %v440 = vadd.f32 %v326, %v439
        %v441 = vpop.f32.mrf.mxu0
        %442 = vmatprep.mubr.f32.mxu0 0.0
        %443 = vmatmul.mubr.f32.gmra.mxu0 %v345
        %v444 = vpop.f32.mrf.mxu0
        %v445 = vadd.f32 %v326, %v444
        %v446 = vpop.f32.mrf.mxu0
        %447 = vmatprep.mubr.f32.mxu0 0.0
        %448 = vmatmul.mubr.f32.gmra.mxu0 %v348
        %v449 = vpop.f32.mrf.mxu0
        %v450 = vadd.f32 %v326, %v449
        %v451 = vpop.f32.mrf.mxu0
        %452 = vmatprep.mubr.f32.mxu0 0.0
        %453 = vmatmul.mubr.f32.gmra.mxu0 %v351
        %v454 = vpop.f32.mrf.mxu0
        %v455 = vadd.f32 %v326, %v454
        %v456 = vpop.f32.mrf.mxu0
        %457 = vdwg.mxu0
        %458 = vxpose.xlu0.b32.start [1/16] %v420, 128
        %459 = vxpose.xlu0.b32.cont [2/16] %v425, 128
        %460 = vxpose.xlu0.b32.cont [3/16] %v430, 128
        %461 = vxpose.xlu0.b32.cont [4/16] %v435, 128
        %462 = vxpose.xlu0.b32.cont [5/16] %v440, 128
        %463 = vxpose.xlu0.b32.cont [6/16] %v445, 128
        %464 = vxpose.xlu0.b32.cont [7/16] %v450, 128
        %465 = vxpose.xlu0.b32.cont [8/16] %v455, 128
        %466 = vxpose.xlu0.b32.cont [9/16] 0.0, 128
        %467 = vxpose.xlu0.b32.cont [10/16] 0.0, 128
        %468 = vxpose.xlu0.b32.cont [11/16] 0.0, 128
        %469 = vxpose.xlu0.b32.cont [12/16] 0.0, 128
        %470 = vxpose.xlu0.b32.cont [13/16] 0.0, 128
        %471 = vxpose.xlu0.b32.cont [14/16] 0.0, 128
        %472 = vxpose.xlu0.b32.cont [15/16] 0.0, 128
        %473 = vxpose.xlu0.b32.end [16/16] 0.0, 128
        %v474 = vpop.trf.xlu0
        %v475 = vpop.trf.xlu0
        %v476 = vpop.trf.xlu0
        %v477 = vpop.trf.xlu0
        %v478 = vpop.trf.xlu0
        %v479 = vpop.trf.xlu0
        %v480 = vpop.trf.xlu0
        %v481 = vpop.trf.xlu0
        %v482 = vpop.trf.xlu0
        %v483 = vpop.trf.xlu0
        %v484 = vpop.trf.xlu0
        %v485 = vpop.trf.xlu0
        %v486 = vpop.trf.xlu0
        %v487 = vpop.trf.xlu0
        %v488 = vpop.trf.xlu0
        %v489 = vpop.trf.xlu0
        %vm490 = vcmask 523264
        %491 = vst.msk [vmem:[%s288] sm:$0xff] %vm490, %v474
        %492 = vst.msk [vmem:[%s288 + $0x8] sm:$0xff] %vm490, %v475
        %s493 = sand.u32 %s173, 1
        %s494 = scalar_lea.sflag [#allocation3], %s493
        %s495 = sand.u32 %s173, 1
        %s496 = smul.addr %s495, 16
        %s497 = scalar_lea.vmem [#allocation2], %s496
        // Predicated region
        $region41: #{tpu_custom_call.1} parent=39 // pred_check
          %p498 = pneg %p183
        $region42: #{tpu_custom_call.1} parent=39 // pred_check_branch
          %500 = sbr.rel (%p498) target = $region44
        $region43: #{tpu_custom_call.1} parent=39 // pred_region
          %s502 = ssub.s32 256, 256
          %503 = vsyncadd %s494, %s502
          %s504 = smul.addr %s23, 2
          %s505 = sadd.s32 %s24, %s504
          %s506 = smul.addr %s505, 128
          %s507 = scalar_lea.hbm %s5, %s506
          %s508 = sshll.u32 %s497, 4
          %s509 = int_to_ptr.vmem [resolvable:$true] %s508
          %514 = dma.vmem_to_hbm [thread:$0]  %s509, 256, %s507, %s494, 128, 128, 8
        $region44: #{tpu_custom_call.1} parent=39 // pred_fallthru
          _
      $region40: #{tpu_custom_call.1} parent=5 // pred_fallthru
        _
      %p515 = scmp.le.s32.totalorder 2, %s14
      // Predicated region
      $region45: #{tpu_custom_call.1} parent=5 // pred_check
        %p516 = pneg %p515
      $region46: #{tpu_custom_call.1} parent=5 // pred_check_branch
        %518 = sbr.rel (%p516) target = $region48
      $region47: #{tpu_custom_call.1} parent=5 // pred_region
        %s519 = ssub.s32 %s14, 2
        // Predicated region
        $region49: #{tpu_custom_call.1} parent=47 // pred_check
          %p520 = pneg %p189
        $region50: #{tpu_custom_call.1} parent=47 // pred_check_branch
          %522 = sbr.rel (%p520) target = $region52
        $region51: #{tpu_custom_call.1} parent=47 // pred_region
          %s523 = sand.u32 %s174, 1
          %s524 = scalar_lea.sflag [#allocation3], %s523
          %s525 = sand.u32 %s174, 1
          %s526 = smul.addr %s525, 16
          %s527 = scalar_lea.vmem [#allocation2], %s526
          %528 = dma.done %s524, 256
        $region52: #{tpu_custom_call.1} parent=47 // pred_fallthru
          _
      $region48: #{tpu_custom_call.1} parent=5 // pred_fallthru
        _
    $region6: #{tpu_custom_call.1} parent=1 // loop_footer
      %s18 = sadd.s32 1, %s14
    $region7: #{tpu_custom_call.1} parent=1 // loop_footer_branch
      %13 = sbr.rel target = $region3
    $region8: #{tpu_custom_call.1} parent=1 // loop_exit
      _
    %529 = vsyncpa [#allocation3], 1
    %s530 = scalar_lea.sflag [#allocation3], 1
    %531 = vsyncpa %s530, 1

// kernel: tpu_custom_call.1
$region0: #{tpu_custom_call.1}
  #allocation0 [shape = 'u32[]', space=smem, size = 0x4, offset = 0x4, fixed_abs, tag = 'smem constant byte address 0x4 - core index']
  #allocation1 [shape = 'u32[144,128]{1,0:T(1,128)}', space=vmem, size = 0x12000, scoped, tag = 'internal scratch']
  %s0 = inlined_call_operand.vmem [shape: f32[2,64,8], index: 0, kind: input, shape index: {}]
  %s1 = inlined_call_operand.vmem [shape: f32[2,8,16], index: 1, kind: input, shape index: {}]
  %s2 = inlined_call_operand.vmem [shape: f32[2,1,16], index: 2, kind: input, shape index: {}]
  %s3 = inlined_call_operand.vmem [shape: f32[2,1,8], index: 3, kind: input, shape index: {}]
  %s4 = inlined_call_operand.vmem [shape: f32[2,1,8], index: 4, kind: input, shape index: {}]
  %s5 = inlined_call_operand.hbm [shape: f32[2,16,64], index: 5, kind: output, shape index: {}]
  %s6 = sld [smem:[#allocation0]]
  $region53: #{tpu_custom_call.1} parent=0
    _
  %s8 = ssub.s32 1, %s6
  %s9 = scalar_select 0, %s8, %s6
  $region1: #{tpu_custom_call.1} parent=0
    #allocation2 [shape = 'u8[16384]{0}', space=vmem, size = 0x4000, scoped, tag = 'output window, operand 0']
    #allocation3 [shape = 's32[2]{0}', space=sflag, size = 0x8, scoped, tag = 'scoped memory for tpu_custom_call.1']
    %10 = vsyncpa [#allocation3], 0
    %s11 = scalar_lea.sflag [#allocation3], 1
    %12 = vsyncpa %s11, 0
    loop: start=0, step=1, limit=4
    $region2: #{tpu_custom_call.1} parent=1 // loop_pre_header
      _
    $region3: #{tpu_custom_call.1} parent=1 // loop_header
      %s14 = sphi 0, %s18
      %p15 = scmp.ge.s32.totalorder %s14, 4
      %s21 = sphi 0, %s33
      %s22 = sphi 0, %s29
      %s23 = sphi 0, %s21
      %s24 = sphi 0, %s22
      %s25 = sphi 0, %s23
      %s26 = sphi 0, %s24
      %s38 = sphi 0, %s40
      %s41 = sphi 0, %s38
      %s42 = sphi 0, %s41
      %s58 = sphi 0, %s42
      %s64 = sphi 0, %s66
      %s67 = sphi 0, %s64
      %s68 = sphi 0, %s67
      %s84 = sphi 0, %s68
      %s90 = sphi 0, %s92
      %s93 = sphi 0, %s90
      %s94 = sphi 0, %s93
      %s110 = sphi 0, %s94
      %s116 = sphi 0, %s118
      %s119 = sphi 0, %s116
      %s120 = sphi 0, %s119
      %s136 = sphi 0, %s120
      %s142 = sphi 0, %s144
      %s145 = sphi 0, %s142
      %s146 = sphi 0, %s145
      %s162 = sphi 0, %s146
      %s170 = sphi 0, %s172
      %s173 = sphi 0, %s170
      %s174 = sphi 0, %s173
      %s190 = sphi 0, %s174
    $region4: #{tpu_custom_call.1} parent=1 // loop_header_branch
      %17 = sbr.rel (%p15) target = $region8
    $region5: #{tpu_custom_call.1} parent=1 // loop_body
      %s19 = ssub.s32 %s14, 1
      %s20 = ssub.s32 %s14, 2
      %s27 = sadd.s32 1, %s22
      %p28 = scmp.ge.s32.totalorder %s27, 1
      %s29 = scalar_select %p28, 0, %s27
      %s30 = sadd.s32 1, %s21
      %s31 = scalar_select %p28, %s30, %s21
      %p32 = scmp.ge.s32.totalorder %s31, 2
      %s33 = scalar_select %p32, 0, %s31
      %s34 = ssub.s32 %s21, %s33
      %s35 = ssub.s32 %s22, %s29
      %s36 = sor.u32 %s34, %s35
      %p37 = scmp.eq.s32.totalorder %s36, 0
      %s39 = sadd.s32 %s38, 1
      %s40 = scalar_select %p37, %s38, %s39
      %p43 = pneg %p37
      %p44 = scmp.eq.s32.totalorder %s14, 1
      %p45 = por %p43, %p44
      %p46 = scmp.ne.s32.totalorder %s38, %s41
      %p47 = scmp.eq.s32.totalorder %s14, 0
      %p48 = por %p46, %p47
      %p49 = scmp.ne.s32.totalorder %s38, %s41
      %p50 = scmp.eq.s32.totalorder %s19, 1
      %p51 = por %p49, %p50
      %p52 = scmp.ne.s32.totalorder %s41, %s42
      %p53 = scmp.eq.s32.totalorder %s19, 0
      %p54 = por %p52, %p53
      %p55 = scmp.ne.s32.totalorder %s41, %s42
      %p56 = scmp.eq.s32.totalorder %s20, 1
      %p57 = por %p55, %p56
      %p59 = scmp.ne.s32.totalorder %s42, %s58
      %p60 = scmp.eq.s32.totalorder %s20, 0
      %p61 = por %p59, %p60
      %s62 = ssub.s32 %s21, %s33
      %p63 = scmp.eq.s32.totalorder %s62, 0
      %s65 = sadd.s32 %s64, 1
      %s66 = scalar_select %p63, %s64, %s65
      %p69 = pneg %p63
      %p70 = scmp.eq.s32.totalorder %s14, 1
      %p71 = por %p69, %p70
      %p72 = scmp.ne.s32.totalorder %s64, %s67
      %p73 = scmp.eq.s32.totalorder %s14, 0
      %p74 = por %p72, %p73
      %p75 = scmp.ne.s32.totalorder %s64, %s67
      %p76 = scmp.eq.s32.totalorder %s19, 1
      %p77 = por %p75, %p76
      %p78 = scmp.ne.s32.totalorder %s67, %s68
      %p79 = scmp.eq.s32.totalorder %s19, 0
      %p80 = por %p78, %p79
      %p81 = scmp.ne.s32.totalorder %s67, %s68
      %p82 = scmp.eq.s32.totalorder %s20, 1
      %p83 = por %p81, %p82
      %p85 = scmp.ne.s32.totalorder %s68, %s84
      %p86 = scmp.eq.s32.totalorder %s20, 0
      %p87 = por %p85, %p86
      %s88 = ssub.s32 %s21, %s33
      %p89 = scmp.eq.s32.totalorder %s88, 0
      %s91 = sadd.s32 %s90, 1
      %s92 = scalar_select %p89, %s90, %s91
      %p95 = pneg %p89
      %p96 = scmp.eq.s32.totalorder %s14, 1
      %p97 = por %p95, %p96
      %p98 = scmp.ne.s32.totalorder %s90, %s93
      %p99 = scmp.eq.s32.totalorder %s14, 0
      %p100 = por %p98, %p99
      %p101 = scmp.ne.s32.totalorder %s90, %s93
      %p102 = scmp.eq.s32.totalorder %s19, 1
      %p103 = por %p101, %p102
      %p104 = scmp.ne.s32.totalorder %s93, %s94
      %p105 = scmp.eq.s32.totalorder %s19, 0
      %p106 = por %p104, %p105
      %p107 = scmp.ne.s32.totalorder %s93, %s94
      %p108 = scmp.eq.s32.totalorder %s20, 1
      %p109 = por %p107, %p108
      %p111 = scmp.ne.s32.totalorder %s94, %s110
      %p112 = scmp.eq.s32.totalorder %s20, 0
      %p113 = por %p111, %p112
      %s114 = ssub.s32 %s21, %s33
      %p115 = scmp.eq.s32.totalorder %s114, 0
      %s117 = sadd.s32 %s116, 1
      %s118 = scalar_select %p115, %s116, %s117
      %p121 = pneg %p115
      %p122 = scmp.eq.s32.totalorder %s14, 1
      %p123 = por %p121, %p122
      %p124 = scmp.ne.s32.totalorder %s116, %s119
      %p125 = scmp.eq.s32.totalorder %s14, 0
      %p126 = por %p124, %p125
      %p127 = scmp.ne.s32.totalorder %s116, %s119
      %p128 = scmp.eq.s32.totalorder %s19, 1
      %p129 = por %p127, %p128
      %p130 = scmp.ne.s32.totalorder %s119, %s120
      %p131 = scmp.eq.s32.totalorder %s19, 0
      %p132 = por %p130, %p131
      %p133 = scmp.ne.s32.totalorder %s119, %s120
      %p134 = scmp.eq.s32.totalorder %s20, 1
      %p135 = por %p133, %p134
      %p137 = scmp.ne.s32.totalorder %s120, %s136
      %p138 = scmp.eq.s32.totalorder %s20, 0
      %p139 = por %p137, %p138
      %s140 = ssub.s32 %s21, %s33
      %p141 = scmp.eq.s32.totalorder %s140, 0
      %s143 = sadd.s32 %s142, 1
      %s144 = scalar_select %p141, %s142, %s143
      %p147 = pneg %p141
      %p148 = scmp.eq.s32.totalorder %s14, 1
      %p149 = por %p147, %p148
      %p150 = scmp.ne.s32.totalorder %s142, %s145
      %p151 = scmp.eq.s32.totalorder %s14, 0
      %p152 = por %p150, %p151
      %p153 = scmp.ne.s32.totalorder %s142, %s145
      %p154 = scmp.eq.s32.totalorder %s19, 1
      %p155 = por %p153, %p154
      %p156 = scmp.ne.s32.totalorder %s145, %s146
      %p157 = scmp.eq.s32.totalorder %s19, 0
      %p158 = por %p156, %p157
      %p159 = scmp.ne.s32.totalorder %s145, %s146
      %p160 = scmp.eq.s32.totalorder %s20, 1
      %p161 = por %p159, %p160
      %p163 = scmp.ne.s32.totalorder %s146, %s162
      %p164 = scmp.eq.s32.totalorder %s20, 0
      %p165 = por %p163, %p164
      %s166 = ssub.s32 %s21, %s33
      %s167 = ssub.s32 %s22, %s29
      %s168 = sor.u32 %s166, %s167
      %p169 = scmp.eq.s32.totalorder %s168, 0
      %s171 = sadd.s32 %s170, 1
      %s172 = scalar_select %p169, %s170, %s171
      %p175 = pneg %p169
      %p176 = scmp.eq.s32.totalorder %s14, 1
      %p177 = por %p175, %p176
      %p178 = scmp.ne.s32.totalorder %s170, %s173
      %p179 = scmp.eq.s32.totalorder %s14, 0
      %p180 = por %p178, %p179
      %p181 = scmp.ne.s32.totalorder %s170, %s173
      %p182 = scmp.eq.s32.totalorder %s19, 1
      %p183 = por %p181, %p182
      %p184 = scmp.ne.s32.totalorder %s173, %s174
      %p185 = scmp.eq.s32.totalorder %s19, 0
      %p186 = por %p184, %p185
      %p187 = scmp.ne.s32.totalorder %s173, %s174
      %p188 = scmp.eq.s32.totalorder %s20, 1
      %p189 = por %p187, %p188
      %p191 = scmp.ne.s32.totalorder %s174, %s190
      %p192 = scmp.eq.s32.totalorder %s20, 0
      %p193 = por %p191, %p192
      %p194 = scmp.le.s32.totalorder 1, %s14
      %p195 = scmp.lt.s32.totalorder %s14, 3
      %p196 = pnand %p194, %p195
      %p197 = pneg %p196
      // Predicated region
      $region9: #{tpu_custom_call.1} parent=5 // pred_check
        _
      $region10: #{tpu_custom_call.1} parent=5 // pred_check_branch
        %199 = sbr.rel (%p196) target = $region12
      $region11: #{tpu_custom_call.1} parent=5 // pred_region
        %s200 = ssub.s32 %s14, 1
      $region12: #{tpu_custom_call.1} parent=5 // pred_fallthru
        _
      %p201 = scmp.lt.s32.totalorder %s14, 2
      // Predicated region
      $region13: #{tpu_custom_call.1} parent=5 // pred_check
        %p202 = pneg %p201
      $region14: #{tpu_custom_call.1} parent=5 // pred_check_branch
        %204 = sbr.rel (%p202) target = $region16
      $region15: #{tpu_custom_call.1} parent=5 // pred_region
        // Predicated region
        $region17: #{tpu_custom_call.1} parent=15 // pred_check
          %p205 = pneg %p48
        $region18: #{tpu_custom_call.1} parent=15 // pred_check_branch
          %207 = sbr.rel (%p205) target = $region20
        $region19: #{tpu_custom_call.1} parent=15 // pred_region
          %s208 = smul.u32 8, %s22
          %p209 = scmp.lt.s32.totalorder %s21, 1
          %s210 = scalar_select %p209, %s21, 1
          %p211 = scmp.lt.s32.totalorder %s208, 7
          %s212 = scalar_select %p211, %s208, 7
          %s213 = smul.addr %s210, 8
          %s214 = sadd.s32 %s212, %s213
          %s215 = smul.addr %s214, 8
          %s216 = scalar_lea.vmem %s0, %s215
          %s217 = smul.u32 8, %s22
        $region20: #{tpu_custom_call.1} parent=15 // pred_fallthru
          _
        // Predicated region
        $region21: #{tpu_custom_call.1} parent=15 // pred_check
          %p218 = pneg %p74
        $region22: #{tpu_custom_call.1} parent=15 // pred_check_branch
          %220 = sbr.rel (%p218) target = $region24
        $region23: #{tpu_custom_call.1} parent=15 // pred_region
          %p221 = scmp.lt.s32.totalorder %s21, 1
          %s222 = scalar_select %p221, %s21, 1
          %s223 = smul.addr %s222, 8
          %s224 = scalar_lea.vmem %s1, %s223
        $region24: #{tpu_custom_call.1} parent=15 // pred_fallthru
          _
        // Predicated region
        $region25: #{tpu_custom_call.1} parent=15 // pred_check
          %p225 = pneg %p100
        $region26: #{tpu_custom_call.1} parent=15 // pred_check_branch
          %227 = sbr.rel (%p225) target = $region28
        $region27: #{tpu_custom_call.1} parent=15 // pred_region
          %p228 = scmp.lt.s32.totalorder %s21, 1
          %s229 = scalar_select %p228, %s21, 1
          %s230 = scalar_lea.vmem %s2, %s229
        $region28: #{tpu_custom_call.1} parent=15 // pred_fallthru
          _
        // Predicated region
        $region29: #{tpu_custom_call.1} parent=15 // pred_check
          %p231 = pneg %p126
        $region30: #{tpu_custom_call.1} parent=15 // pred_check_branch
          %233 = sbr.rel (%p231) target = $region32
        $region31: #{tpu_custom_call.1} parent=15 // pred_region
          %p234 = scmp.lt.s32.totalorder %s21, 1
          %s235 = scalar_select %p234, %s21, 1
          %s236 = scalar_lea.vmem %s3, %s235
        $region32: #{tpu_custom_call.1} parent=15 // pred_fallthru
          _
        // Predicated region
        $region33: #{tpu_custom_call.1} parent=15 // pred_check
          %p237 = pneg %p152
        $region34: #{tpu_custom_call.1} parent=15 // pred_check_branch
          %239 = sbr.rel (%p237) target = $region36
        $region35: #{tpu_custom_call.1} parent=15 // pred_region
          %p240 = scmp.lt.s32.totalorder %s21, 1
          %s241 = scalar_select %p240, %s21, 1
          %s242 = scalar_lea.vmem %s4, %s241
        $region36: #{tpu_custom_call.1} parent=15 // pred_fallthru
          _
      $region16: #{tpu_custom_call.1} parent=5 // pred_fallthru
        _
      %p243 = scmp.le.s32.totalorder 1, %s14
      %p244 = scmp.lt.s32.totalorder %s14, 3
      %p245 = pnand %p243, %p244
      %p246 = pneg %p245
      // Predicated region
      $region37: #{tpu_custom_call.1} parent=5 // pred_check
        _
      $region38: #{tpu_custom_call.1} parent=5 // pred_check_branch
        %248 = sbr.rel (%p245) target = $region40
      $region39: #{tpu_custom_call.1} parent=5 // pred_region
        %s249 = ssub.s32 %s14, 1
        %s250 = smul.u32 8, %s24
        %p251 = scmp.lt.s32.totalorder %s23, 1
        %s252 = scalar_select %p251, %s23, 1
        %p253 = scmp.lt.s32.totalorder %s250, 7
        %s254 = scalar_select %p253, %s250, 7
        %s255 = smul.addr %s252, 8
        %s256 = sadd.s32 %s254, %s255
        %s257 = smul.addr %s256, 8
        %s258 = scalar_lea.vmem %s0, %s257
        %p259 = pneg %p54
        %p260 = pneg %p51
        %p261 = scmp.lt.s32.totalorder %s23, 1
        %s262 = scalar_select %p261, %s23, 1
        %s263 = smul.addr %s262, 8
        %s264 = scalar_lea.vmem %s1, %s263
        %p265 = pneg %p80
        %p266 = pneg %p77
        %p267 = scmp.lt.s32.totalorder %s23, 1
        %s268 = scalar_select %p267, %s23, 1
        %s269 = scalar_lea.vmem %s2, %s268
        %p270 = pneg %p106
        %p271 = pneg %p103
        %p272 = scmp.lt.s32.totalorder %s23, 1
        %s273 = scalar_select %p272, %s23, 1
        %s274 = scalar_lea.vmem %s3, %s273
        %p275 = pneg %p132
        %p276 = pneg %p129
        %p277 = scmp.lt.s32.totalorder %s23, 1
        %s278 = scalar_select %p277, %s23, 1
        %s279 = scalar_lea.vmem %s4, %s278
        %p280 = pneg %p158
        %p281 = pneg %p155
        %p282 = pneg %p186
        %p283 = pneg %p183
        %s284 = sand.u32 %s173, 1
        %s285 = scalar_lea.sflag [#allocation3], %s284
        %s286 = sand.u32 %s173, 1
        %s287 = smul.addr %s286, 16
        %s288 = scalar_lea.vmem [#allocation2], %s287
        %s289 = smul.u32 8, %s24
        %p290 = scmp.lt.s32.totalorder %s23, 1
        %s291 = scalar_select %p290, %s23, 1
        %p292 = scmp.lt.s32.totalorder %s289, 7
        %s293 = scalar_select %p292, %s289, 7
        %s294 = smul.addr %s291, 8
        %s295 = sadd.s32 %s293, %s294
        %s296 = smul.addr %s295, 8
        %s297 = scalar_lea.vmem %s0, %s296
        %s298 = smul.u32 8, %s24
        %p299 = scmp.lt.s32.totalorder %s23, 1
        %s300 = scalar_select %p299, %s23, 1
        %s301 = smul.addr %s300, 8
        %s302 = scalar_lea.vmem %s1, %s301
        %p303 = scmp.lt.s32.totalorder %s23, 1
        %s304 = scalar_select %p303, %s23, 1
        %s305 = scalar_lea.vmem %s2, %s304
        %p306 = scmp.lt.s32.totalorder %s23, 1
        %s307 = scalar_select %p306, %s23, 1
        %s308 = scalar_lea.vmem %s3, %s307
        %p309 = scmp.lt.s32.totalorder %s23, 1
        %s310 = scalar_select %p309, %s23, 1
        %s311 = scalar_lea.vmem %s4, %s310
        %v312 = vld [vmem:[%s297] sm:$0xff]
        %v313 = vld [vmem:[%s297 + $0x8] sm:$0xff]
        %v314 = vld [vmem:[%s297 + $0x10] sm:$0xff]
        %v315 = vld [vmem:[%s297 + $0x18] sm:$0xff]
        %v316 = vld [vmem:[%s297 + $0x20] sm:$0xff]
        %v317 = vld [vmem:[%s297 + $0x28] sm:$0xff]
        %v318 = vld [vmem:[%s297 + $0x30] sm:$0xff]
        %v319 = vld [vmem:[%s297 + $0x38] sm:$0xff]
        %v320 = vld [vmem:[%s302] sm:$0xff]
        %v321 = vld [vmem:[%s305] sm:$0x1]
        %v323 = vlaneseq
        %v324 = vshrl.u32 %v323, 7
        %v325 = vsub.s32 0, %v324
        %v326 = vrot.slane %v321, %v325
        %vm328 = vcmask 64512
        %v330 = vsel %vm328, %v312, 0
        %v333 = vsel %vm328, %v313, 0
        %v336 = vsel %vm328, %v314, 0
        %v339 = vsel %vm328, %v315, 0
        %v342 = vsel %vm328, %v316, 0
        %v345 = vsel %vm328, %v317, 0
        %v348 = vsel %vm328, %v318, 0
        %v351 = vsel %vm328, %v319, 0
        %353 = vmatprep.subr.mxu0 0.0
        %354 = vmatpush1.msra.mxu0 0.0
        %355 = vmatprep.subr.mxu0 0.0
        %356 = vmatpush1.msra.mxu0 0.0
        %357 = vmatprep.subr.mxu0 0.0
        %358 = vmatpush1.msra.mxu0 0.0
        %359 = vmatprep.subr.mxu0 0.0
        %360 = vmatpush1.msra.mxu0 0.0
        %361 = vmatprep.subr.mxu0 0.0
        %362 = vmatpush1.msra.mxu0 0.0
        %363 = vmatprep.subr.mxu0 0.0
        %364 = vmatpush1.msra.mxu0 0.0
        %365 = vmatprep.subr.mxu0 0.0
        %366 = vmatpush1.msra.mxu0 0.0
        %367 = vmatprep.subr.mxu0 0.0
        %368 = vmatpush1.msra.mxu0 0.0
        %369 = vmatprep.subr.mxu0 0.0
        %370 = vmatpush1.msra.mxu0 0.0
        %371 = vmatprep.subr.mxu0 0.0
        %372 = vmatpush1.msra.mxu0 0.0
        %373 = vmatprep.subr.mxu0 0.0
        %374 = vmatpush1.msra.mxu0 0.0
        %375 = vmatprep.subr.mxu0 0.0
        %376 = vmatpush1.msra.mxu0 0.0
        %377 = vmatprep.subr.mxu0 0.0
        %378 = vmatpush1.msra.mxu0 0.0
        %379 = vmatprep.subr.mxu0 0.0
        %380 = vmatpush1.msra.mxu0 0.0
        %381 = vmatprep.subr.mxu0 0.0
        %382 = vmatpush1.msra.mxu0 0.0
        %383 = vmatprep.subr.mxu0 0.0
        %384 = vmatpush1.msra.mxu0 %v320
        %385 = vmatprep.subr.mxu0 0.0
        %386 = vmatpush2.msra.mxu0 0.0
        %387 = vmatprep.subr.mxu0 0.0
        %388 = vmatpush2.msra.mxu0 0.0
        %389 = vmatprep.subr.mxu0 0.0
        %390 = vmatpush2.msra.mxu0 0.0
        %391 = vmatprep.subr.mxu0 0.0
        %392 = vmatpush2.msra.mxu0 0.0
        %393 = vmatprep.subr.mxu0 0.0
        %394 = vmatpush2.msra.mxu0 0.0
        %395 = vmatprep.subr.mxu0 0.0
        %396 = vmatpush2.msra.mxu0 0.0
        %397 = vmatprep.subr.mxu0 0.0
        %398 = vmatpush2.msra.mxu0 0.0
        %399 = vmatprep.subr.mxu0 0.0
        %400 = vmatpush2.msra.mxu0 0.0
        %401 = vmatprep.subr.mxu0 0.0
        %402 = vmatpush2.msra.mxu0 0.0
        %403 = vmatprep.subr.mxu0 0.0
        %404 = vmatpush2.msra.mxu0 0.0
        %405 = vmatprep.subr.mxu0 0.0
        %406 = vmatpush2.msra.mxu0 0.0
        %407 = vmatprep.subr.mxu0 0.0
        %408 = vmatpush2.msra.mxu0 0.0
        %409 = vmatprep.subr.mxu0 0.0
        %410 = vmatpush2.msra.mxu0 0.0
        %411 = vmatprep.subr.mxu0 0.0
        %412 = vmatpush2.msra.mxu0 0.0
        %413 = vmatprep.subr.mxu0 0.0
        %414 = vmatpush2.msra.mxu0 0.0
        %415 = vmatprep.subr.mxu0 0.0
        %416 = vmatpush2.msra.mxu0 0.0
        %417 = vmatprep.mubr.f32.mxu0 0.0
        %418 = vmatmul.mubr.f32.gmra.mxu0 %v330
        %v419 = vpop.f32.mrf.mxu0
        %v420 = vadd.f32 %v326, %v419
        %v421 = vpop.f32.mrf.mxu0
        %422 = vmatprep.mubr.f32.mxu0 0.0
        %423 = vmatmul.mubr.f32.gmra.mxu0 %v333
        %v424 = vpop.f32.mrf.mxu0
        %v425 = vadd.f32 %v326, %v424
        %v426 = vpop.f32.mrf.mxu0
        %427 = vmatprep.mubr.f32.mxu0 0.0
        %428 = vmatmul.mubr.f32.gmra.mxu0 %v336
        %v429 = vpop.f32.mrf.mxu0
        %v430 = vadd.f32 %v326, %v429
        %v431 = vpop.f32.mrf.mxu0
        %432 = vmatprep.mubr.f32.mxu0 0.0
        %433 = vmatmul.mubr.f32.gmra.mxu0 %v339
        %v434 = vpop.f32.mrf.mxu0
        %v435 = vadd.f32 %v326, %v434
        %v436 = vpop.f32.mrf.mxu0
        %437 = vmatprep.mubr.f32.mxu0 0.0
        %438 = vmatmul.mubr.f32.gmra.mxu0 %v342
        %v439 = vpop.f32.mrf.mxu0
        %v440 = vadd.f32 %v326, %v439
        %v441 = vpop.f32.mrf.mxu0
        %442 = vmatprep.mubr.f32.mxu0 0.0
        %443 = vmatmul.mubr.f32.gmra.mxu0 %v345
        %v444 = vpop.f32.mrf.mxu0
        %v445 = vadd.f32 %v326, %v444
        %v446 = vpop.f32.mrf.mxu0
        %447 = vmatprep.mubr.f32.mxu0 0.0
        %448 = vmatmul.mubr.f32.gmra.mxu0 %v348
        %v449 = vpop.f32.mrf.mxu0
        %v450 = vadd.f32 %v326, %v449
        %v451 = vpop.f32.mrf.mxu0
        %452 = vmatprep.mubr.f32.mxu0 0.0
        %453 = vmatmul.mubr.f32.gmra.mxu0 %v351
        %v454 = vpop.f32.mrf.mxu0
        %v455 = vadd.f32 %v326, %v454
        %v456 = vpop.f32.mrf.mxu0
        %457 = vdwg.mxu0
        %458 = vxpose.xlu0.b32.start [1/16] %v420, 128
        %459 = vxpose.xlu0.b32.cont [2/16] %v425, 128
        %460 = vxpose.xlu0.b32.cont [3/16] %v430, 128
        %461 = vxpose.xlu0.b32.cont [4/16] %v435, 128
        %462 = vxpose.xlu0.b32.cont [5/16] %v440, 128
        %463 = vxpose.xlu0.b32.cont [6/16] %v445, 128
        %464 = vxpose.xlu0.b32.cont [7/16] %v450, 128
        %465 = vxpose.xlu0.b32.cont [8/16] %v455, 128
        %466 = vxpose.xlu0.b32.cont [9/16] 0.0, 128
        %467 = vxpose.xlu0.b32.cont [10/16] 0.0, 128
        %468 = vxpose.xlu0.b32.cont [11/16] 0.0, 128
        %469 = vxpose.xlu0.b32.cont [12/16] 0.0, 128
        %470 = vxpose.xlu0.b32.cont [13/16] 0.0, 128
        %471 = vxpose.xlu0.b32.cont [14/16] 0.0, 128
        %472 = vxpose.xlu0.b32.cont [15/16] 0.0, 128
        %473 = vxpose.xlu0.b32.end [16/16] 0.0, 128
        %v474 = vpop.trf.xlu0
        %v475 = vpop.trf.xlu0
        %v476 = vpop.trf.xlu0
        %v477 = vpop.trf.xlu0
        %v478 = vpop.trf.xlu0
        %v479 = vpop.trf.xlu0
        %v480 = vpop.trf.xlu0
        %v481 = vpop.trf.xlu0
        %v482 = vpop.trf.xlu0
        %v483 = vpop.trf.xlu0
        %v484 = vpop.trf.xlu0
        %v485 = vpop.trf.xlu0
        %v486 = vpop.trf.xlu0
        %v487 = vpop.trf.xlu0
        %v488 = vpop.trf.xlu0
        %v489 = vpop.trf.xlu0
        %vm490 = vcmask 523264
        %491 = vst.msk [vmem:[%s288] sm:$0xff] %vm490, %v474
        %492 = vst.msk [vmem:[%s288 + $0x8] sm:$0xff] %vm490, %v475
        %s493 = sand.u32 %s173, 1
        %s494 = scalar_lea.sflag [#allocation3], %s493
        %s495 = sand.u32 %s173, 1
        %s496 = smul.addr %s495, 16
        %s497 = scalar_lea.vmem [#allocation2], %s496
        // Predicated region
        $region41: #{tpu_custom_call.1} parent=39 // pred_check
          %p498 = pneg %p183
        $region42: #{tpu_custom_call.1} parent=39 // pred_check_branch
          %500 = sbr.rel (%p498) target = $region44
        $region43: #{tpu_custom_call.1} parent=39 // pred_region
          %s502 = ssub.s32 256, 256
          %503 = vsyncadd %s494, %s502
          %s504 = smul.addr %s23, 2
          %s505 = sadd.s32 %s24, %s504
          %s506 = smul.addr %s505, 128
          %s507 = scalar_lea.hbm %s5, %s506
          %s508 = sshll.u32 %s497, 4
          %s509 = int_to_ptr.vmem [resolvable:$true] %s508
          %514 = dma.vmem_to_hbm [thread:$0]  %s509, 256, %s507, %s494, 128, 128, 8
        $region44: #{tpu_custom_call.1} parent=39 // pred_fallthru
          _
      $region40: #{tpu_custom_call.1} parent=5 // pred_fallthru
        _
      %p515 = scmp.le.s32.totalorder 2, %s14
      // Predicated region
      $region45: #{tpu_custom_call.1} parent=5 // pred_check
        %p516 = pneg %p515
      $region46: #{tpu_custom_call.1} parent=5 // pred_check_branch
        %518 = sbr.rel (%p516) target = $region48
      $region47: #{tpu_custom_call.1} parent=5 // pred_region
        %s519 = ssub.s32 %s14, 2
        // Predicated region
        $region49: #{tpu_custom_call.1} parent=47 // pred_check
          %p520 = pneg %p189
        $region50: #{tpu_custom_call.1} parent=47 // pred_check_branch
          %522 = sbr.rel (%p520) target = $region52
        $region51: #{tpu_custom_call.1} parent=47 // pred_region
          %s523 = sand.u32 %s174, 1
          %s524 = scalar_lea.sflag [#allocation3], %s523
          %s525 = sand.u32 %s174, 1
          %s526 = smul.addr %s525, 16
          %s527 = scalar_lea.vmem [#allocation2], %s526
          %528 = dma.done %s524, 256
        $region52: #{tpu_custom_call.1} parent=47 // pred_fallthru
          _
      $region48: #{tpu_custom_call.1} parent=5 // pred_fallthru
        _
    $region6: #{tpu_custom_call.1} parent=1 // loop_footer
      %s18 = sadd.s32 1, %s14
    $region7: #{tpu_custom_call.1} parent=1 // loop_footer_branch
      %13 = sbr.rel target = $region3
    $region8: #{tpu_custom_call.1} parent=1 // loop_exit
      _
    %529 = vsyncpa [#allocation3], 1
    %s530 = scalar_lea.sflag [#allocation3], 1
    %531 = vsyncpa %s530, 1

</llo_original>
